<compile_context>
chip_gen: v5e
topology: v5e:2x2
jax: 0.10.0
libtpu: 0.0.40
codegen_flags: <defaults>
</compile_context>

<pallas_src>
import functools
import math

import jax
import jax.numpy as jnp
from jax import lax
from jax.experimental import pallas as pl
from jax.experimental.pallas import tpu as pltpu


# ----------------------------------------------------------------------------
# Fused MHA kernel: one grid step == one batch element.
#   wqkv : (3, D, D)   packed query/key/value projection weights
#   bqkv : (3, 1, D)   packed biases
#   wout : (D, D), bout : (1, D)
#   q/k/v inputs : (S, D) block (batch dim squeezed via None in the BlockSpec)
#   outputs      : out (S, D), attn (H, S, S)
# ----------------------------------------------------------------------------
def _mha_kernel(wqkv_ref, bqkv_ref, wout_ref, bout_ref,
                q_ref, k_ref, v_ref,
                out_ref, attn_ref, *, num_heads, d_k):
    xq = q_ref[...]  # (S, D)
    xk = k_ref[...]
    xv = v_ref[...]

    scale = 1.0 / math.sqrt(d_k)

    # Q/K/V projections (weights resident in VMEM for the whole grid).  The
    # 1/sqrt(d_k) scale is folded into q once, on the (S, D) projection output.
    q = (jnp.dot(xq, wqkv_ref[0], preferred_element_type=jnp.float32)
         + bqkv_ref[0]) * scale
    k = jnp.dot(xk, wqkv_ref[1], preferred_element_type=jnp.float32) + bqkv_ref[1]
    v = jnp.dot(xv, wqkv_ref[2], preferred_element_type=jnp.float32) + bqkv_ref[2]

    probs = []
    ctx_heads = []
    for h in range(num_heads):  # static unroll; all heads in one grid step
        lo = h * d_k
        qh = q[:, lo:lo + d_k]  # (S, d_k)
        kh = k[:, lo:lo + d_k]
        vh = v[:, lo:lo + d_k]

        # scores = qh @ kh^T, expressed as a contraction over d_k on both
        # operands so no explicit transpose is materialized.
        s = lax.dot_general(qh, kh, (((1,), (1,)), ((), ())),
                            preferred_element_type=jnp.float32)  # (S, S)

        # Numerically-stable softmax over the last axis (matches F.softmax).
        s = s - jnp.max(s, axis=-1, keepdims=True)
        e = jnp.exp(s)
        inv_l = pl.reciprocal(jnp.sum(e, axis=-1, keepdims=True), approx=False)
        p = e * inv_l

        probs.append(p)
        ctx_heads.append(jnp.dot(p, vh, preferred_element_type=jnp.float32))

    # Single store of all heads' attention weights.
    attn_ref[...] = jnp.stack(probs).astype(attn_ref.dtype)

    # Merged-head layout (S, D) assembled in-kernel -> no post-kernel transpose.
    context = jnp.concatenate(ctx_heads, axis=1)
    out_ref[...] = (
        jnp.dot(context, wout_ref[...], preferred_element_type=jnp.float32)
        + bout_ref[...]
    ).astype(out_ref.dtype)


def multi_head_attention(params, query, key, value, num_heads):
    """query/key/value: (B, S, d_model) -> (output (B,S,d_model), attn (B,H,S,S))."""
    b, s, d_model = query.shape
    d_k = d_model // num_heads
    kernel = functools.partial(_mha_kernel, num_heads=num_heads, d_k=d_k)

    out, attn = pl.pallas_call(
        kernel,
        out_shape=(
            jax.ShapeDtypeStruct((b, s, d_model), jnp.float32),
            jax.ShapeDtypeStruct((b, num_heads, s, s), jnp.float32),
        ),
        grid=(b,),
        in_specs=[
            pl.BlockSpec((3, d_model, d_model), lambda i: (0, 0, 0)),  # w_qkv
            pl.BlockSpec((3, 1, d_model), lambda i: (0, 0, 0)),        # b_qkv
            pl.BlockSpec((d_model, d_model), lambda i: (0, 0)),        # w_out
            pl.BlockSpec((1, d_model), lambda i: (0, 0)),              # b_out
            pl.BlockSpec((None, s, d_model), lambda i: (i, 0, 0)),     # query
            pl.BlockSpec((None, s, d_model), lambda i: (i, 0, 0)),     # key
            pl.BlockSpec((None, s, d_model), lambda i: (i, 0, 0)),     # value
        ],
        out_specs=(
            pl.BlockSpec((None, s, d_model), lambda i: (i, 0, 0)),          # output
            pl.BlockSpec((None, num_heads, s, s), lambda i: (i, 0, 0, 0)),  # attn
        ),
        compiler_params=pltpu.CompilerParams(
            dimension_semantics=("parallel",),  # batch axis shards across TCs (v7x)
        ),
    )(params["w_qkv"], params["b_qkv"], params["w_out"], params["b_out"],
      query, key, value)
    return out, attn


# ----------------------------------------------------------------------------
# Parameter init (nn.Linear(d_model, d_model)-shaped), packed for the kernel.
# ----------------------------------------------------------------------------
def init_mha_params(key, d_model):
    keys = jax.random.split(key, 8)
    bound = 1.0 / math.sqrt(d_model)

    def lin(kw, kb):
        # Weight stored as (d_in, d_out) so that y = x @ W + b.
        w = jax.random.uniform(kw, (d_model, d_model), jnp.float32, -bound, bound)
        b = jax.random.uniform(kb, (d_model,), jnp.float32, -bound, bound)
        return w, b

    wq, bq = lin(keys[0], keys[1])
    wk, bk = lin(keys[2], keys[3])
    wv, bv = lin(keys[4], keys[5])
    wo, bo = lin(keys[6], keys[7])
    return {
        "w_qkv": jnp.stack([wq, wk, wv]),               # (3, D, D)
        "b_qkv": jnp.stack([bq, bk, bv])[:, None, :],   # (3, 1, D)
        "w_out": wo,                                    # (D, D)
        "b_out": bo[None, :],                           # (1, D)
    }


# ----------------------------------------------------------------------------
# Pure-JAX reference for correctness check
# ----------------------------------------------------------------------------
def _reference(params, query, key, value, num_heads):
    b, s, d_model = query.shape
    d_k = d_model // num_heads
    wq, wk, wv = params["w_qkv"][0], params["w_qkv"][1], params["w_qkv"][2]
    bq, bk, bv = params["b_qkv"][0, 0], params["b_qkv"][1, 0], params["b_qkv"][2, 0]

    def split(x):
        return x.reshape(b, s, num_heads, d_k).transpose(0, 2, 1, 3)

    q = split(query @ wq + bq)
    k = split(key @ wk + bk)
    v = split(value @ wv + bv)

    scores = jnp.einsum("bhqd,bhkd->bhqk", q, k) / jnp.sqrt(jnp.float32(d_k))
    attn = jax.nn.softmax(scores, axis=-1)
    ctx = jnp.einsum("bhqk,bhkd->bhqd", attn, v)
    ctx = ctx.transpose(0, 2, 1, 3).reshape(b, s, d_model)
    out = ctx @ params["w_out"] + params["b_out"][0]
    return out, attn


if __name__ == "__main__":
    batch, seq, d_model, num_heads = 2, 8, 32, 4

    root = jax.random.PRNGKey(0)
    k_params, k_q, k_k, k_v = jax.random.split(root, 4)

    params = init_mha_params(k_params, d_model)
    query = jax.random.normal(k_q, (batch, seq, d_model), jnp.float32)
    key = jax.random.normal(k_k, (batch, seq, d_model), jnp.float32)
    value = jax.random.normal(k_v, (batch, seq, d_model), jnp.float32)

    mha = jax.jit(multi_head_attention, static_argnums=4)
    out, attn = mha(params, query, key, value, num_heads)
    out = jax.block_until_ready(out)
    attn = jax.block_until_ready(attn)

    ref_out, ref_attn = _reference(params, query, key, value, num_heads)

    assert out.shape == (batch, seq, d_model)
    assert attn.shape == (batch, num_heads, seq, seq)
    assert jnp.allclose(out, ref_out, atol=1e-4, rtol=1e-4)
    assert jnp.allclose(attn, ref_attn, atol=1e-4, rtol=1e-4)

    print("KERNEL_OK")
</pallas_src>

<mosaic_0001>
module attributes {stable_mosaic.version = 11 : i64} {
  func.func @_mha_kernel(%arg0: i32, %arg1: memref<3x32x32xf32, #tpu.memory_space<vmem>>, %arg2: memref<3x1x32xf32, #tpu.memory_space<vmem>>, %arg3: memref<32x32xf32, #tpu.memory_space<vmem>>, %arg4: memref<1x32xf32, #tpu.memory_space<vmem>>, %arg5: memref<1x8x32xf32, #tpu.memory_space<vmem>>, %arg6: memref<1x8x32xf32, #tpu.memory_space<vmem>>, %arg7: memref<1x8x32xf32, #tpu.memory_space<vmem>>, %arg8: memref<1x8x32xf32, #tpu.memory_space<vmem>>, %arg9: memref<1x4x8x8xf32, #tpu.memory_space<vmem>>) attributes {dimension_semantics = [#tpu.dimension_semantics<parallel>], iteration_bounds = array<i64: 2>, scalar_prefetch = 0 : i64, scratch_operands = 0 : i64, tpu.core_type = #tpu.core_type<tc>, window_params = [{pipeline_mode = #tpu.pipeline_mode<synchronous>, transform_indices = @transform_0, window_bounds = array<i64: 3, 32, 32>}, {pipeline_mode = #tpu.pipeline_mode<synchronous>, transform_indices = @transform_1, window_bounds = array<i64: 3, 1, 32>}, {pipeline_mode = #tpu.pipeline_mode<synchronous>, transform_indices = @transform_2, window_bounds = array<i64: 32, 32>}, {pipeline_mode = #tpu.pipeline_mode<synchronous>, transform_indices = @transform_3, window_bounds = array<i64: 1, 32>}, {transform_indices = @transform_4, window_bounds = array<i64: 1, 8, 32>}, {transform_indices = @transform_5, window_bounds = array<i64: 1, 8, 32>}, {transform_indices = @transform_6, window_bounds = array<i64: 1, 8, 32>}, {transform_indices = @transform_7, window_bounds = array<i64: 1, 8, 32>}, {transform_indices = @transform_8, window_bounds = array<i64: 1, 4, 8, 8>}]} {
    %c0 = arith.constant 0 : index
    %c0_0 = arith.constant 0 : index
    %c0_1 = arith.constant 0 : index
    %0 = vector.load %arg5[%c0, %c0_0, %c0_1] : memref<1x8x32xf32, #tpu.memory_space<vmem>>, vector<1x8x32xf32>
    %1 = vector.shape_cast %0 : vector<1x8x32xf32> to vector<8x32xf32>
    %c0_2 = arith.constant 0 : index
    %c0_3 = arith.constant 0 : index
    %c0_4 = arith.constant 0 : index
    %2 = vector.load %arg6[%c0_2, %c0_3, %c0_4] : memref<1x8x32xf32, #tpu.memory_space<vmem>>, vector<1x8x32xf32>
    %3 = vector.shape_cast %2 : vector<1x8x32xf32> to vector<8x32xf32>
    %c0_5 = arith.constant 0 : index
    %c0_6 = arith.constant 0 : index
    %c0_7 = arith.constant 0 : index
    %4 = vector.load %arg7[%c0_5, %c0_6, %c0_7] : memref<1x8x32xf32, #tpu.memory_space<vmem>>, vector<1x8x32xf32>
    %5 = vector.shape_cast %4 : vector<1x8x32xf32> to vector<8x32xf32>
    %c0_8 = arith.constant 0 : index
    %c0_9 = arith.constant 0 : index
    %c0_10 = arith.constant 0 : index
    %6 = vector.load %arg1[%c0_8, %c0_9, %c0_10] : memref<3x32x32xf32, #tpu.memory_space<vmem>>, vector<1x32x32xf32>
    %7 = vector.shape_cast %6 : vector<1x32x32xf32> to vector<32x32xf32>
    %cst = arith.constant dense<0.000000e+00> : vector<8x32xf32>
    %8 = tpu.matmul %1, %7, %cst {dimension_numbers = #tpu.dot_dimension_numbers<[1], [0], [0], [1], [0, 0, 1, 1], [], []>} : vector<8x32xf32>, vector<32x32xf32>, vector<8x32xf32> -> vector<8x32xf32>
    %c0_11 = arith.constant 0 : index
    %c0_12 = arith.constant 0 : index
    %c0_13 = arith.constant 0 : index
    %9 = vector.load %arg2[%c0_11, %c0_12, %c0_13] : memref<3x1x32xf32, #tpu.memory_space<vmem>>, vector<1x1x32xf32>
    %10 = vector.shape_cast %9 : vector<1x1x32xf32> to vector<1x32xf32>
    %11 = vector.broadcast %10 : vector<1x32xf32> to vector<8x32xf32>
    %12 = arith.addf %8, %11 : vector<8x32xf32>
    %cst_14 = arith.constant 0.353553385 : f32
    %13 = vector.broadcast %cst_14 : f32 to vector<8x32xf32>
    %14 = arith.mulf %12, %13 : vector<8x32xf32>
    %c1 = arith.constant 1 : index
    %c0_15 = arith.constant 0 : index
    %c0_16 = arith.constant 0 : index
    %15 = vector.load %arg1[%c1, %c0_15, %c0_16] : memref<3x32x32xf32, #tpu.memory_space<vmem>>, vector<1x32x32xf32>
    %16 = vector.shape_cast %15 : vector<1x32x32xf32> to vector<32x32xf32>
    %cst_17 = arith.constant dense<0.000000e+00> : vector<8x32xf32>
    %17 = tpu.matmul %3, %16, %cst_17 {dimension_numbers = #tpu.dot_dimension_numbers<[1], [0], [0], [1], [0, 0, 1, 1], [], []>} : vector<8x32xf32>, vector<32x32xf32>, vector<8x32xf32> -> vector<8x32xf32>
    %c1_18 = arith.constant 1 : index
    %c0_19 = arith.constant 0 : index
    %c0_20 = arith.constant 0 : index
    %18 = vector.load %arg2[%c1_18, %c0_19, %c0_20] : memref<3x1x32xf32, #tpu.memory_space<vmem>>, vector<1x1x32xf32>
    %19 = vector.shape_cast %18 : vector<1x1x32xf32> to vector<1x32xf32>
    %20 = vector.broadcast %19 : vector<1x32xf32> to vector<8x32xf32>
    %21 = arith.addf %17, %20 : vector<8x32xf32>
    %c2 = arith.constant 2 : index
    %c0_21 = arith.constant 0 : index
    %c0_22 = arith.constant 0 : index
    %22 = vector.load %arg1[%c2, %c0_21, %c0_22] : memref<3x32x32xf32, #tpu.memory_space<vmem>>, vector<1x32x32xf32>
    %23 = vector.shape_cast %22 : vector<1x32x32xf32> to vector<32x32xf32>
    %cst_23 = arith.constant dense<0.000000e+00> : vector<8x32xf32>
    %24 = tpu.matmul %5, %23, %cst_23 {dimension_numbers = #tpu.dot_dimension_numbers<[1], [0], [0], [1], [0, 0, 1, 1], [], []>} : vector<8x32xf32>, vector<32x32xf32>, vector<8x32xf32> -> vector<8x32xf32>
    %c2_24 = arith.constant 2 : index
    %c0_25 = arith.constant 0 : index
    %c0_26 = arith.constant 0 : index
    %25 = vector.load %arg2[%c2_24, %c0_25, %c0_26] : memref<3x1x32xf32, #tpu.memory_space<vmem>>, vector<1x1x32xf32>
    %26 = vector.shape_cast %25 : vector<1x1x32xf32> to vector<1x32xf32>
    %27 = vector.broadcast %26 : vector<1x32xf32> to vector<8x32xf32>
    %28 = arith.addf %24, %27 : vector<8x32xf32>
    %29 = vector.extract_strided_slice %14 {offsets = [0, 0], sizes = [8, 8], strides = [1, 1]} : vector<8x32xf32> to vector<8x8xf32>
    %30 = vector.extract_strided_slice %21 {offsets = [0, 0], sizes = [8, 8], strides = [1, 1]} : vector<8x32xf32> to vector<8x8xf32>
    %31 = vector.extract_strided_slice %28 {offsets = [0, 0], sizes = [8, 8], strides = [1, 1]} : vector<8x32xf32> to vector<8x8xf32>
    %cst_27 = arith.constant dense<0.000000e+00> : vector<8x8xf32>
    %32 = tpu.matmul %29, %30, %cst_27 {dimension_numbers = #tpu.dot_dimension_numbers<[1], [1], [0], [0], [0, 0, 1, 0], [], []>} : vector<8x8xf32>, vector<8x8xf32>, vector<8x8xf32> -> vector<8x8xf32>
    %cst_28 = arith.constant dense<0xFF800000> : vector<8xf32>
    %33 = vector.multi_reduction <maximumf>, %32, %cst_28 [1] : vector<8x8xf32> to vector<8xf32>
    %34 = vector.shape_cast %33 : vector<8xf32> to vector<8x1xf32>
    %35 = vector.broadcast %34 : vector<8x1xf32> to vector<8x8xf32>
    %36 = arith.subf %32, %35 : vector<8x8xf32>
    %37 = math.exp %36 : vector<8x8xf32>
    %cst_29 = arith.constant dense<0.000000e+00> : vector<8xf32>
    %38 = vector.multi_reduction <add>, %37, %cst_29 [1] : vector<8x8xf32> to vector<8xf32>
    %39 = vector.shape_cast %38 : vector<8xf32> to vector<8x1xf32>
    %40 = tpu.reciprocal %39 : vector<8x1xf32> -> vector<8x1xf32>
    %41 = vector.broadcast %40 : vector<8x1xf32> to vector<8x8xf32>
    %42 = arith.mulf %37, %41 : vector<8x8xf32>
    %cst_30 = arith.constant dense<0.000000e+00> : vector<8x8xf32>
    %43 = tpu.matmul %42, %31, %cst_30 {dimension_numbers = #tpu.dot_dimension_numbers<[1], [0], [0], [1], [0, 0, 1, 1], [], []>} : vector<8x8xf32>, vector<8x8xf32>, vector<8x8xf32> -> vector<8x8xf32>
    %44 = vector.extract_strided_slice %14 {offsets = [0, 8], sizes = [8, 8], strides = [1, 1]} : vector<8x32xf32> to vector<8x8xf32>
    %45 = vector.extract_strided_slice %21 {offsets = [0, 8], sizes = [8, 8], strides = [1, 1]} : vector<8x32xf32> to vector<8x8xf32>
    %46 = vector.extract_strided_slice %28 {offsets = [0, 8], sizes = [8, 8], strides = [1, 1]} : vector<8x32xf32> to vector<8x8xf32>
    %cst_31 = arith.constant dense<0.000000e+00> : vector<8x8xf32>
    %47 = tpu.matmul %44, %45, %cst_31 {dimension_numbers = #tpu.dot_dimension_numbers<[1], [1], [0], [0], [0, 0, 1, 0], [], []>} : vector<8x8xf32>, vector<8x8xf32>, vector<8x8xf32> -> vector<8x8xf32>
    %cst_32 = arith.constant dense<0xFF800000> : vector<8xf32>
    %48 = vector.multi_reduction <maximumf>, %47, %cst_32 [1] : vector<8x8xf32> to vector<8xf32>
    %49 = vector.shape_cast %48 : vector<8xf32> to vector<8x1xf32>
    %50 = vector.broadcast %49 : vector<8x1xf32> to vector<8x8xf32>
    %51 = arith.subf %47, %50 : vector<8x8xf32>
    %52 = math.exp %51 : vector<8x8xf32>
    %cst_33 = arith.constant dense<0.000000e+00> : vector<8xf32>
    %53 = vector.multi_reduction <add>, %52, %cst_33 [1] : vector<8x8xf32> to vector<8xf32>
    %54 = vector.shape_cast %53 : vector<8xf32> to vector<8x1xf32>
    %55 = tpu.reciprocal %54 : vector<8x1xf32> -> vector<8x1xf32>
    %56 = vector.broadcast %55 : vector<8x1xf32> to vector<8x8xf32>
    %57 = arith.mulf %52, %56 : vector<8x8xf32>
    %cst_34 = arith.constant dense<0.000000e+00> : vector<8x8xf32>
    %58 = tpu.matmul %57, %46, %cst_34 {dimension_numbers = #tpu.dot_dimension_numbers<[1], [0], [0], [1], [0, 0, 1, 1], [], []>} : vector<8x8xf32>, vector<8x8xf32>, vector<8x8xf32> -> vector<8x8xf32>
    %59 = vector.extract_strided_slice %14 {offsets = [0, 16], sizes = [8, 8], strides = [1, 1]} : vector<8x32xf32> to vector<8x8xf32>
    %60 = vector.extract_strided_slice %21 {offsets = [0, 16], sizes = [8, 8], strides = [1, 1]} : vector<8x32xf32> to vector<8x8xf32>
    %61 = vector.extract_strided_slice %28 {offsets = [0, 16], sizes = [8, 8], strides = [1, 1]} : vector<8x32xf32> to vector<8x8xf32>
    %cst_35 = arith.constant dense<0.000000e+00> : vector<8x8xf32>
    %62 = tpu.matmul %59, %60, %cst_35 {dimension_numbers = #tpu.dot_dimension_numbers<[1], [1], [0], [0], [0, 0, 1, 0], [], []>} : vector<8x8xf32>, vector<8x8xf32>, vector<8x8xf32> -> vector<8x8xf32>
    %cst_36 = arith.constant dense<0xFF800000> : vector<8xf32>
    %63 = vector.multi_reduction <maximumf>, %62, %cst_36 [1] : vector<8x8xf32> to vector<8xf32>
    %64 = vector.shape_cast %63 : vector<8xf32> to vector<8x1xf32>
    %65 = vector.broadcast %64 : vector<8x1xf32> to vector<8x8xf32>
    %66 = arith.subf %62, %65 : vector<8x8xf32>
    %67 = math.exp %66 : vector<8x8xf32>
    %cst_37 = arith.constant dense<0.000000e+00> : vector<8xf32>
    %68 = vector.multi_reduction <add>, %67, %cst_37 [1] : vector<8x8xf32> to vector<8xf32>
    %69 = vector.shape_cast %68 : vector<8xf32> to vector<8x1xf32>
    %70 = tpu.reciprocal %69 : vector<8x1xf32> -> vector<8x1xf32>
    %71 = vector.broadcast %70 : vector<8x1xf32> to vector<8x8xf32>
    %72 = arith.mulf %67, %71 : vector<8x8xf32>
    %cst_38 = arith.constant dense<0.000000e+00> : vector<8x8xf32>
    %73 = tpu.matmul %72, %61, %cst_38 {dimension_numbers = #tpu.dot_dimension_numbers<[1], [0], [0], [1], [0, 0, 1, 1], [], []>} : vector<8x8xf32>, vector<8x8xf32>, vector<8x8xf32> -> vector<8x8xf32>
    %74 = vector.extract_strided_slice %14 {offsets = [0, 24], sizes = [8, 8], strides = [1, 1]} : vector<8x32xf32> to vector<8x8xf32>
    %75 = vector.extract_strided_slice %21 {offsets = [0, 24], sizes = [8, 8], strides = [1, 1]} : vector<8x32xf32> to vector<8x8xf32>
    %76 = vector.extract_strided_slice %28 {offsets = [0, 24], sizes = [8, 8], strides = [1, 1]} : vector<8x32xf32> to vector<8x8xf32>
    %cst_39 = arith.constant dense<0.000000e+00> : vector<8x8xf32>
    %77 = tpu.matmul %74, %75, %cst_39 {dimension_numbers = #tpu.dot_dimension_numbers<[1], [1], [0], [0], [0, 0, 1, 0], [], []>} : vector<8x8xf32>, vector<8x8xf32>, vector<8x8xf32> -> vector<8x8xf32>
    %cst_40 = arith.constant dense<0xFF800000> : vector<8xf32>
    %78 = vector.multi_reduction <maximumf>, %77, %cst_40 [1] : vector<8x8xf32> to vector<8xf32>
    %79 = vector.shape_cast %78 : vector<8xf32> to vector<8x1xf32>
    %80 = vector.broadcast %79 : vector<8x1xf32> to vector<8x8xf32>
    %81 = arith.subf %77, %80 : vector<8x8xf32>
    %82 = math.exp %81 : vector<8x8xf32>
    %cst_41 = arith.constant dense<0.000000e+00> : vector<8xf32>
    %83 = vector.multi_reduction <add>, %82, %cst_41 [1] : vector<8x8xf32> to vector<8xf32>
    %84 = vector.shape_cast %83 : vector<8xf32> to vector<8x1xf32>
    %85 = tpu.reciprocal %84 : vector<8x1xf32> -> vector<8x1xf32>
    %86 = vector.broadcast %85 : vector<8x1xf32> to vector<8x8xf32>
    %87 = arith.mulf %82, %86 : vector<8x8xf32>
    %cst_42 = arith.constant dense<0.000000e+00> : vector<8x8xf32>
    %88 = tpu.matmul %87, %76, %cst_42 {dimension_numbers = #tpu.dot_dimension_numbers<[1], [0], [0], [1], [0, 0, 1, 1], [], []>} : vector<8x8xf32>, vector<8x8xf32>, vector<8x8xf32> -> vector<8x8xf32>
    %89 = vector.shape_cast %42 : vector<8x8xf32> to vector<1x8x8xf32>
    %90 = vector.shape_cast %57 : vector<8x8xf32> to vector<1x8x8xf32>
    %91 = vector.shape_cast %72 : vector<8x8xf32> to vector<1x8x8xf32>
    %92 = vector.shape_cast %87 : vector<8x8xf32> to vector<1x8x8xf32>
    %93 = tpu.concatenate %89, %90, %91, %92 in 0 : vector<1x8x8xf32>, vector<1x8x8xf32>, vector<1x8x8xf32>, vector<1x8x8xf32> -> vector<4x8x8xf32>
    %c0_43 = arith.constant 0 : index
    %c0_44 = arith.constant 0 : index
    %c0_45 = arith.constant 0 : index
    %c0_46 = arith.constant 0 : index
    %94 = vector.load %arg9[%c0_43, %c0_44, %c0_45, %c0_46] : memref<1x4x8x8xf32, #tpu.memory_space<vmem>>, vector<1x4x8x8xf32>
    %95 = vector.shape_cast %94 : vector<1x4x8x8xf32> to vector<4x8x8xf32>
    %96 = vector.shape_cast %93 : vector<4x8x8xf32> to vector<1x4x8x8xf32>
    tpu.vector_store %arg9[%c0_43, %c0_44, %c0_45, %c0_46], %96 {strides = array<i32>} : memref<1x4x8x8xf32, #tpu.memory_space<vmem>>, vector<1x4x8x8xf32>,
    %97 = tpu.concatenate %43, %58, %73, %88 in 1 : vector<8x8xf32>, vector<8x8xf32>, vector<8x8xf32>, vector<8x8xf32> -> vector<8x32xf32>
    %c0_47 = arith.constant 0 : index
    %c0_48 = arith.constant 0 : index
    %98 = vector.load %arg3[%c0_47, %c0_48] : memref<32x32xf32, #tpu.memory_space<vmem>>, vector<32x32xf32>
    %cst_49 = arith.constant dense<0.000000e+00> : vector<8x32xf32>
    %99 = tpu.matmul %97, %98, %cst_49 {dimension_numbers = #tpu.dot_dimension_numbers<[1], [0], [0], [1], [0, 0, 1, 1], [], []>} : vector<8x32xf32>, vector<32x32xf32>, vector<8x32xf32> -> vector<8x32xf32>
    %c0_50 = arith.constant 0 : index
    %c0_51 = arith.constant 0 : index
    %100 = vector.load %arg4[%c0_50, %c0_51] : memref<1x32xf32, #tpu.memory_space<vmem>>, vector<1x32xf32>
    %101 = vector.broadcast %100 : vector<1x32xf32> to vector<8x32xf32>
    %102 = arith.addf %99, %101 : vector<8x32xf32>
    %c0_52 = arith.constant 0 : index
    %c0_53 = arith.constant 0 : index
    %c0_54 = arith.constant 0 : index
    %103 = vector.load %arg8[%c0_52, %c0_53, %c0_54] : memref<1x8x32xf32, #tpu.memory_space<vmem>>, vector<1x8x32xf32>
    %104 = vector.shape_cast %103 : vector<1x8x32xf32> to vector<8x32xf32>
    %105 = vector.shape_cast %102 : vector<8x32xf32> to vector<1x8x32xf32>
    tpu.vector_store %arg8[%c0_52, %c0_53, %c0_54], %105 {strides = array<i32>} : memref<1x8x32xf32, #tpu.memory_space<vmem>>, vector<1x8x32xf32>,
    return
  }
  func.func @transform_0(%arg0: i32) -> (i32, i32, i32) {
    %c0_i32 = arith.constant 0 : i32
    %c0_i32_0 = arith.constant 0 : i32
    %c0_i32_1 = arith.constant 0 : i32
    %c0_i32_2 = arith.constant 0 : i32
    return %c0_i32, %c0_i32_0, %c0_i32_1 : i32, i32, i32
  }
  func.func @transform_1(%arg0: i32) -> (i32, i32, i32) {
    %c0_i32 = arith.constant 0 : i32
    %c0_i32_0 = arith.constant 0 : i32
    %c0_i32_1 = arith.constant 0 : i32
    %c0_i32_2 = arith.constant 0 : i32
    return %c0_i32, %c0_i32_0, %c0_i32_1 : i32, i32, i32
  }
  func.func @transform_2(%arg0: i32) -> (i32, i32) {
    %c0_i32 = arith.constant 0 : i32
    %c0_i32_0 = arith.constant 0 : i32
    %c0_i32_1 = arith.constant 0 : i32
    return %c0_i32, %c0_i32_0 : i32, i32
  }
  func.func @transform_3(%arg0: i32) -> (i32, i32) {
    %c0_i32 = arith.constant 0 : i32
    %c0_i32_0 = arith.constant 0 : i32
    %c0_i32_1 = arith.constant 0 : i32
    return %c0_i32, %c0_i32_0 : i32, i32
  }
  func.func @transform_4(%arg0: i32) -> (i32, i32, i32) {
    %c0_i32 = arith.constant 0 : i32
    %c0_i32_0 = arith.constant 0 : i32
    %c0_i32_1 = arith.constant 0 : i32
    return %arg0, %c0_i32, %c0_i32_0 : i32, i32, i32
  }
  func.func @transform_5(%arg0: i32) -> (i32, i32, i32) {
    %c0_i32 = arith.constant 0 : i32
    %c0_i32_0 = arith.constant 0 : i32
    %c0_i32_1 = arith.constant 0 : i32
    return %arg0, %c0_i32, %c0_i32_0 : i32, i32, i32
  }
  func.func @transform_6(%arg0: i32) -> (i32, i32, i32) {
    %c0_i32 = arith.constant 0 : i32
    %c0_i32_0 = arith.constant 0 : i32
    %c0_i32_1 = arith.constant 0 : i32
    return %arg0, %c0_i32, %c0_i32_0 : i32, i32, i32
  }
  func.func @transform_7(%arg0: i32) -> (i32, i32, i32) {
    %c0_i32 = arith.constant 0 : i32
    %c0_i32_0 = arith.constant 0 : i32
    %c0_i32_1 = arith.constant 0 : i32
    return %arg0, %c0_i32, %c0_i32_0 : i32, i32, i32
  }
  func.func @transform_8(%arg0: i32) -> (i32, i32, i32, i32) {
    %c0_i32 = arith.constant 0 : i32
    %c0_i32_0 = arith.constant 0 : i32
    %c0_i32_1 = arith.constant 0 : i32
    %c0_i32_2 = arith.constant 0 : i32
    return %arg0, %c0_i32, %c0_i32_0, %c0_i32_1 : i32, i32, i32, i32
  }
}

</mosaic_0001>

<llo_original>
// kernel: multi_head_attention.1
$region0: #{multi_head_attention.1}
  #allocation0 [shape = 'u32[]', space=smem, size = 0x4, offset = 0x4, fixed_abs, tag = 'smem constant byte address 0x4 - core index']
  #allocation1 [shape = 'u32[72,128]{1,0:T(1,128)}', space=vmem, size = 0x9000, scoped, tag = 'internal scratch']
  %s0 = inlined_call_operand.hbm [shape: f32[3,32,32], index: 0, kind: input, shape index: {}]
  %s1 = inlined_call_operand.hbm [shape: f32[3,1,32], index: 1, kind: input, shape index: {}]
  %s2 = inlined_call_operand.hbm [shape: f32[32,32], index: 2, kind: input, shape index: {}]
  %s3 = inlined_call_operand.hbm [shape: f32[1,32], index: 3, kind: input, shape index: {}]
  %s4 = inlined_call_operand.hbm [shape: f32[2,8,32], index: 4, kind: input, shape index: {}]
  %s5 = inlined_call_operand.hbm [shape: f32[2,8,32], index: 5, kind: input, shape index: {}]
  %s6 = inlined_call_operand.hbm [shape: f32[2,8,32], index: 6, kind: input, shape index: {}]
  %s7 = inlined_call_operand.hbm [shape: f32[2,8,32], index: 7, kind: output, shape index: {0}]
  %s8 = inlined_call_operand.hbm [shape: f32[2,4,8,8], index: 8, kind: output, shape index: {1}]
  %9 = xla_tuple %s7, %s8
  %s10 = sld [smem:[#allocation0]]
  $region97: #{multi_head_attention.1} parent=0
    _
  %s12 = ssub.s32 1, %s10
  %s13 = scalar_select 0, %s12, %s10
  $region1: #{multi_head_attention.1} parent=0
    #allocation2 [shape = 'u8[49152]{0}', space=vmem, size = 0xc000, scoped, tag = 'input window, operand 0, single buffered']
    #allocation3 [shape = 's32[2]{0}', space=sflag, size = 0x8, scoped, tag = 'scoped memory for multi_head_attention.1']
    #allocation4 [shape = 's32[2]{0}', space=sflag, size = 0x8, scoped, tag = 'scoped memory for multi_head_attention.1']
    #allocation5 [shape = 'u8[1536]{0}', space=vmem, size = 0x800, scoped, tag = 'input window, operand 1, single buffered']
    #allocation6 [shape = 's32[1]{0}', space=sflag, size = 0x4, scoped, tag = 'scoped memory for multi_head_attention.1']
    #allocation7 [shape = 'u8[16384]{0}', space=vmem, size = 0x4000, scoped, tag = 'input window, operand 2, single buffered']
    #allocation8 [shape = 'u8[512]{0}', space=vmem, size = 0x400, scoped, tag = 'input window, operand 3, single buffered']
    #allocation9 [shape = 's32[1]{0}', space=sflag, size = 0x4, scoped, tag = 'scoped memory for multi_head_attention.1']
    #allocation10 [shape = 'u8[8192]{0}', space=vmem, size = 0x2000, scoped, tag = 'input window, operand 4']
    #allocation11 [shape = 'u8[8192]{0}', space=vmem, size = 0x2000, scoped, tag = 'input window, operand 5']
    #allocation12 [shape = 'u8[8192]{0}', space=vmem, size = 0x2000, scoped, tag = 'input window, operand 6']
    #allocation13 [shape = 'u8[8192]{0}', space=vmem, size = 0x2000, scoped, tag = 'output window, operand 0']
    #allocation14 [shape = 'u8[32768]{0}', space=vmem, size = 0x8000, scoped, tag = 'output window, operand 1']
    #allocation15 [shape = 's32[2]{0}', space=sflag, size = 0x8, scoped, tag = 'scoped memory for multi_head_attention.1']
    %14 = vsyncpa [#allocation3], 0
    %15 = vsyncpa [#allocation6], 0
    %16 = vsyncpa [#allocation9], 0
    %17 = vsyncpa [#allocation4], 0
    %s18 = scalar_lea.sflag [#allocation4], 1
    %19 = vsyncpa %s18, 0
    %20 = vsyncpa [#allocation15], 0
    %s21 = scalar_lea.sflag [#allocation15], 1
    %22 = vsyncpa %s21, 0
    loop: start=0, step=1, limit=4
    $region2: #{multi_head_attention.1} parent=1 // loop_pre_header
      _
    $region3: #{multi_head_attention.1} parent=1 // loop_header
      %s24 = sphi 0, %s28
      %p25 = scmp.ge.s32.totalorder %s24, 4
      %s32 = sphi 0, %s32
      %s34 = sphi 0, %s32
      %s35 = sphi 0, %s34
      %s49 = sphi 0, %s35
      %s53 = sphi 0, %s53
      %s55 = sphi 0, %s53
      %s56 = sphi 0, %s55
      %s70 = sphi 0, %s56
      %s74 = sphi 0, %s74
      %s76 = sphi 0, %s74
      %s77 = sphi 0, %s76
      %s91 = sphi 0, %s77
      %s95 = sphi 0, %s95
      %s97 = sphi 0, %s95
      %s98 = sphi 0, %s97
      %s112 = sphi 0, %s98
      %s118 = sphi 0, %s120
      %s121 = sphi 0, %s118
      %s122 = sphi 0, %s121
      %s138 = sphi 0, %s122
      %s144 = sphi 0, %s146
      %s147 = sphi 0, %s144
      %s148 = sphi 0, %s147
      %s164 = sphi 0, %s148
      %s170 = sphi 0, %s172
      %s173 = sphi 0, %s170
      %s174 = sphi 0, %s173
      %s190 = sphi 0, %s174
      %s196 = sphi 0, %s198
      %s199 = sphi 0, %s196
      %s200 = sphi 0, %s199
      %s216 = sphi 0, %s200
      %s222 = sphi 0, %s224
      %s225 = sphi 0, %s222
      %s226 = sphi 0, %s225
      %s242 = sphi 0, %s226
    $region4: #{multi_head_attention.1} parent=1 // loop_header_branch
      %27 = sbr.rel (%p25) target = $region8
    $region5: #{multi_head_attention.1} parent=1 // loop_body
      %s29 = ssub.s32 %s24, 1
      %s30 = ssub.s32 %s24, 2
      %s31 = sadd.s32 %s24, 1
      %s33 = sadd.s32 %s32, 1
      %p36 = scmp.eq.s32.totalorder %s24, 1
      %p37 = scmp.ne.s32.totalorder %s32, %s34
      %p38 = scmp.eq.s32.totalorder %s24, 0
      %p39 = por %p37, %p38
      %p40 = scmp.ne.s32.totalorder %s32, %s34
      %p41 = scmp.eq.s32.totalorder %s29, 1
      %p42 = por %p40, %p41
      %p43 = scmp.ne.s32.totalorder %s34, %s35
      %p44 = scmp.eq.s32.totalorder %s29, 0
      %p45 = por %p43, %p44
      %p46 = scmp.ne.s32.totalorder %s34, %s35
      %p47 = scmp.eq.s32.totalorder %s30, 1
      %p48 = por %p46, %p47
      %p50 = scmp.ne.s32.totalorder %s35, %s49
      %p51 = scmp.eq.s32.totalorder %s30, 0
      %p52 = por %p50, %p51
      %s54 = sadd.s32 %s53, 1
      %p57 = scmp.eq.s32.totalorder %s24, 1
      %p58 = scmp.ne.s32.totalorder %s53, %s55
      %p59 = scmp.eq.s32.totalorder %s24, 0
      %p60 = por %p58, %p59
      %p61 = scmp.ne.s32.totalorder %s53, %s55
      %p62 = scmp.eq.s32.totalorder %s29, 1
      %p63 = por %p61, %p62
      %p64 = scmp.ne.s32.totalorder %s55, %s56
      %p65 = scmp.eq.s32.totalorder %s29, 0
      %p66 = por %p64, %p65
      %p67 = scmp.ne.s32.totalorder %s55, %s56
      %p68 = scmp.eq.s32.totalorder %s30, 1
      %p69 = por %p67, %p68
      %p71 = scmp.ne.s32.totalorder %s56, %s70
      %p72 = scmp.eq.s32.totalorder %s30, 0
      %p73 = por %p71, %p72
      %s75 = sadd.s32 %s74, 1
      %p78 = scmp.eq.s32.totalorder %s24, 1
      %p79 = scmp.ne.s32.totalorder %s74, %s76
      %p80 = scmp.eq.s32.totalorder %s24, 0
      %p81 = por %p79, %p80
      %p82 = scmp.ne.s32.totalorder %s74, %s76
      %p83 = scmp.eq.s32.totalorder %s29, 1
      %p84 = por %p82, %p83
      %p85 = scmp.ne.s32.totalorder %s76, %s77
      %p86 = scmp.eq.s32.totalorder %s29, 0
      %p87 = por %p85, %p86
      %p88 = scmp.ne.s32.totalorder %s76, %s77
      %p89 = scmp.eq.s32.totalorder %s30, 1
      %p90 = por %p88, %p89
      %p92 = scmp.ne.s32.totalorder %s77, %s91
      %p93 = scmp.eq.s32.totalorder %s30, 0
      %p94 = por %p92, %p93
      %s96 = sadd.s32 %s95, 1
      %p99 = scmp.eq.s32.totalorder %s24, 1
      %p100 = scmp.ne.s32.totalorder %s95, %s97
      %p101 = scmp.eq.s32.totalorder %s24, 0
      %p102 = por %p100, %p101
      %p103 = scmp.ne.s32.totalorder %s95, %s97
      %p104 = scmp.eq.s32.totalorder %s29, 1
      %p105 = por %p103, %p104
      %p106 = scmp.ne.s32.totalorder %s97, %s98
      %p107 = scmp.eq.s32.totalorder %s29, 0
      %p108 = por %p106, %p107
      %p109 = scmp.ne.s32.totalorder %s97, %s98
      %p110 = scmp.eq.s32.totalorder %s30, 1
      %p111 = por %p109, %p110
      %p113 = scmp.ne.s32.totalorder %s98, %s112
      %p114 = scmp.eq.s32.totalorder %s30, 0
      %p115 = por %p113, %p114
      %s116 = ssub.s32 %s24, %s31
      %p117 = scmp.eq.s32.totalorder %s116, 0
      %s119 = sadd.s32 %s118, 1
      %s120 = scalar_select %p117, %s118, %s119
      %p123 = pneg %p117
      %p124 = scmp.eq.s32.totalorder %s24, 1
      %p125 = por %p123, %p124
      %p126 = scmp.ne.s32.totalorder %s118, %s121
      %p127 = scmp.eq.s32.totalorder %s24, 0
      %p128 = por %p126, %p127
      %p129 = scmp.ne.s32.totalorder %s118, %s121
      %p130 = scmp.eq.s32.totalorder %s29, 1
      %p131 = por %p129, %p130
      %p132 = scmp.ne.s32.totalorder %s121, %s122
      %p133 = scmp.eq.s32.totalorder %s29, 0
      %p134 = por %p132, %p133
      %p135 = scmp.ne.s32.totalorder %s121, %s122
      %p136 = scmp.eq.s32.totalorder %s30, 1
      %p137 = por %p135, %p136
      %p139 = scmp.ne.s32.totalorder %s122, %s138
      %p140 = scmp.eq.s32.totalorder %s30, 0
      %p141 = por %p139, %p140
      %s142 = ssub.s32 %s24, %s31
      %p143 = scmp.eq.s32.totalorder %s142, 0
      %s145 = sadd.s32 %s144, 1
      %s146 = scalar_select %p143, %s144, %s145
      %p149 = pneg %p143
      %p150 = scmp.eq.s32.totalorder %s24, 1
      %p151 = por %p149, %p150
      %p152 = scmp.ne.s32.totalorder %s144, %s147
      %p153 = scmp.eq.s32.totalorder %s24, 0
      %p154 = por %p152, %p153
      %p155 = scmp.ne.s32.totalorder %s144, %s147
      %p156 = scmp.eq.s32.totalorder %s29, 1
      %p157 = por %p155, %p156
      %p158 = scmp.ne.s32.totalorder %s147, %s148
      %p159 = scmp.eq.s32.totalorder %s29, 0
      %p160 = por %p158, %p159
      %p161 = scmp.ne.s32.totalorder %s147, %s148
      %p162 = scmp.eq.s32.totalorder %s30, 1
      %p163 = por %p161, %p162
      %p165 = scmp.ne.s32.totalorder %s148, %s164
      %p166 = scmp.eq.s32.totalorder %s30, 0
      %p167 = por %p165, %p166
      %s168 = ssub.s32 %s24, %s31
      %p169 = scmp.eq.s32.totalorder %s168, 0
      %s171 = sadd.s32 %s170, 1
      %s172 = scalar_select %p169, %s170, %s171
      %p175 = pneg %p169
      %p176 = scmp.eq.s32.totalorder %s24, 1
      %p177 = por %p175, %p176
      %p178 = scmp.ne.s32.totalorder %s170, %s173
      %p179 = scmp.eq.s32.totalorder %s24, 0
      %p180 = por %p178, %p179
      %p181 = scmp.ne.s32.totalorder %s170, %s173
      %p182 = scmp.eq.s32.totalorder %s29, 1
      %p183 = por %p181, %p182
      %p184 = scmp.ne.s32.totalorder %s173, %s174
      %p185 = scmp.eq.s32.totalorder %s29, 0
      %p186 = por %p184, %p185
      %p187 = scmp.ne.s32.totalorder %s173, %s174
      %p188 = scmp.eq.s32.totalorder %s30, 1
      %p189 = por %p187, %p188
      %p191 = scmp.ne.s32.totalorder %s174, %s190
      %p192 = scmp.eq.s32.totalorder %s30, 0
      %p193 = por %p191, %p192
      %s194 = ssub.s32 %s24, %s31
      %p195 = scmp.eq.s32.totalorder %s194, 0
      %s197 = sadd.s32 %s196, 1
      %s198 = scalar_select %p195, %s196, %s197
      %p201 = pneg %p195
      %p202 = scmp.eq.s32.totalorder %s24, 1
      %p203 = por %p201, %p202
      %p204 = scmp.ne.s32.totalorder %s196, %s199
      %p205 = scmp.eq.s32.totalorder %s24, 0
      %p206 = por %p204, %p205
      %p207 = scmp.ne.s32.totalorder %s196, %s199
      %p208 = scmp.eq.s32.totalorder %s29, 1
      %p209 = por %p207, %p208
      %p210 = scmp.ne.s32.totalorder %s199, %s200
      %p211 = scmp.eq.s32.totalorder %s29, 0
      %p212 = por %p210, %p211
      %p213 = scmp.ne.s32.totalorder %s199, %s200
      %p214 = scmp.eq.s32.totalorder %s30, 1
      %p215 = por %p213, %p214
      %p217 = scmp.ne.s32.totalorder %s200, %s216
      %p218 = scmp.eq.s32.totalorder %s30, 0
      %p219 = por %p217, %p218
      %s220 = ssub.s32 %s24, %s31
      %p221 = scmp.eq.s32.totalorder %s220, 0
      %s223 = sadd.s32 %s222, 1
      %s224 = scalar_select %p221, %s222, %s223
      %p227 = pneg %p221
      %p228 = scmp.eq.s32.totalorder %s24, 1
      %p229 = por %p227, %p228
      %p230 = scmp.ne.s32.totalorder %s222, %s225
      %p231 = scmp.eq.s32.totalorder %s24, 0
      %p232 = por %p230, %p231
      %p233 = scmp.ne.s32.totalorder %s222, %s225
      %p234 = scmp.eq.s32.totalorder %s29, 1
      %p235 = por %p233, %p234
      %p236 = scmp.ne.s32.totalorder %s225, %s226
      %p237 = scmp.eq.s32.totalorder %s29, 0
      %p238 = por %p236, %p237
      %p239 = scmp.ne.s32.totalorder %s225, %s226
      %p240 = scmp.eq.s32.totalorder %s30, 1
      %p241 = por %p239, %p240
      %p243 = scmp.ne.s32.totalorder %s226, %s242
      %p244 = scmp.eq.s32.totalorder %s30, 0
      %p245 = por %p243, %p244
      %p246 = scmp.le.s32.totalorder 1, %s24
      %p247 = scmp.lt.s32.totalorder %s24, 3
      %p248 = pnand %p246, %p247
      %p249 = pneg %p248
      // Predicated region
      $region9: #{multi_head_attention.1} parent=5 // pred_check
        _
      $region10: #{multi_head_attention.1} parent=5 // pred_check_branch
        %251 = sbr.rel (%p248) target = $region12
      $region11: #{multi_head_attention.1} parent=5 // pred_region
        %s252 = ssub.s32 %s24, 1
        // Predicated region
        $region13: #{multi_head_attention.1} parent=11 // pred_check
          %p253 = pneg %p45
        $region14: #{multi_head_attention.1} parent=11 // pred_check_branch
          %255 = sbr.rel (%p253) target = $region16
        $region15: #{multi_head_attention.1} parent=11 // pred_region
          %257 = vsyncadd [#allocation3], 0
          %s258 = sshll.u32 %s0, 4
          %s259 = int_to_ptr.hbm [resolvable:$true] %s258
          %s260 = sshll.u32 [#allocation2], 4
          %s261 = int_to_ptr.vmem [resolvable:$true] %s260
          %266 = dma.hbm_to_vmem [thread:$0]  %s259, 1536, %s261, [#allocation3], 128, 128, 8
        $region16: #{multi_head_attention.1} parent=11 // pred_fallthru
          _
        // Predicated region
        $region17: #{multi_head_attention.1} parent=11 // pred_check
          %p267 = pneg %p66
        $region18: #{multi_head_attention.1} parent=11 // pred_check_branch
          %269 = sbr.rel (%p267) target = $region20
        $region19: #{multi_head_attention.1} parent=11 // pred_region
          %271 = vsyncadd [#allocation6], 0
          %s272 = sshll.u32 %s1, 4
          %s273 = int_to_ptr.hbm [resolvable:$true] %s272
          %s274 = sshll.u32 [#allocation5], 4
          %s275 = int_to_ptr.vmem [resolvable:$true] %s274
          %280 = dma.hbm_to_vmem [thread:$0]  %s273, 48, %s275, [#allocation6], 16, 16, 1
        $region20: #{multi_head_attention.1} parent=11 // pred_fallthru
          _
        // Predicated region
        $region21: #{multi_head_attention.1} parent=11 // pred_check
          %p281 = pneg %p87
        $region22: #{multi_head_attention.1} parent=11 // pred_check_branch
          %283 = sbr.rel (%p281) target = $region24
        $region23: #{multi_head_attention.1} parent=11 // pred_region
          %285 = vsyncadd [#allocation6], 0
          %s286 = sshll.u32 %s2, 4
          %s287 = int_to_ptr.hbm [resolvable:$true] %s286
          %s288 = sshll.u32 [#allocation7], 4
          %s289 = int_to_ptr.vmem [resolvable:$true] %s288
          %294 = dma.hbm_to_vmem [thread:$0]  %s287, 512, %s289, [#allocation6], 128, 128, 8
        $region24: #{multi_head_attention.1} parent=11 // pred_fallthru
          _
        // Predicated region
        $region25: #{multi_head_attention.1} parent=11 // pred_check
          %p295 = pneg %p108
        $region26: #{multi_head_attention.1} parent=11 // pred_check_branch
          %297 = sbr.rel (%p295) target = $region28
        $region27: #{multi_head_attention.1} parent=11 // pred_region
          %299 = vsyncadd [#allocation9], 0
          %s301 = sshll.u32 %s3, 4
          %s302 = int_to_ptr.hbm [resolvable:$true] %s301
          %s303 = sshll.u32 [#allocation8], 4
          %s304 = int_to_ptr.vmem [resolvable:$true] %s303
          %306 = dma.hbm_to_vmem [thread:$0]  %s302, 16, %s304, [#allocation9]
        $region28: #{multi_head_attention.1} parent=11 // pred_fallthru
          _
      $region12: #{multi_head_attention.1} parent=5 // pred_fallthru
        _
      %p307 = scmp.lt.s32.totalorder %s24, 2
      // Predicated region
      $region29: #{multi_head_attention.1} parent=5 // pred_check
        %p308 = pneg %p307
      $region30: #{multi_head_attention.1} parent=5 // pred_check_branch
        %310 = sbr.rel (%p308) target = $region32
      $region31: #{multi_head_attention.1} parent=5 // pred_region
        // Predicated region
        $region33: #{multi_head_attention.1} parent=31 // pred_check
          %p311 = pneg %p128
        $region34: #{multi_head_attention.1} parent=31 // pred_check_branch
          %313 = sbr.rel (%p311) target = $region36
        $region35: #{multi_head_attention.1} parent=31 // pred_region
          %s314 = sand.u32 %s24, 1
          %s315 = scalar_lea.sflag [#allocation3], %s314
          %s316 = sand.u32 %s118, 1
          %s317 = smul.addr %s316, 8
          %s318 = scalar_lea.vmem [#allocation10], %s317
          %320 = vsyncadd %s315, 0
          %s321 = smul.addr %s24, 8
          %s322 = scalar_lea.hbm %s4, %s321
          %s324 = sshll.u32 %s322, 4
          %s325 = int_to_ptr.hbm [resolvable:$true] %s324
          %s326 = sshll.u32 %s318, 4
          %s327 = int_to_ptr.vmem [resolvable:$true] %s326
          %329 = dma.hbm_to_vmem [thread:$0]  %s325, 128, %s327, %s315
        $region36: #{multi_head_attention.1} parent=31 // pred_fallthru
          _
        // Predicated region
        $region37: #{multi_head_attention.1} parent=31 // pred_check
          %p330 = pneg %p154
        $region38: #{multi_head_attention.1} parent=31 // pred_check_branch
          %332 = sbr.rel (%p330) target = $region40
        $region39: #{multi_head_attention.1} parent=31 // pred_region
          %s333 = sand.u32 %s24, 1
          %s334 = scalar_lea.sflag [#allocation3], %s333
          %s335 = sand.u32 %s144, 1
          %s336 = smul.addr %s335, 8
          %s337 = scalar_lea.vmem [#allocation11], %s336
          %339 = vsyncadd %s334, 0
          %s340 = smul.addr %s24, 8
          %s341 = scalar_lea.hbm %s5, %s340
          %s343 = sshll.u32 %s341, 4
          %s344 = int_to_ptr.hbm [resolvable:$true] %s343
          %s345 = sshll.u32 %s337, 4
          %s346 = int_to_ptr.vmem [resolvable:$true] %s345
          %348 = dma.hbm_to_vmem [thread:$0]  %s344, 128, %s346, %s334
        $region40: #{multi_head_attention.1} parent=31 // pred_fallthru
          _
        // Predicated region
        $region41: #{multi_head_attention.1} parent=31 // pred_check
          %p349 = pneg %p180
        $region42: #{multi_head_attention.1} parent=31 // pred_check_branch
          %351 = sbr.rel (%p349) target = $region44
        $region43: #{multi_head_attention.1} parent=31 // pred_region
          %s352 = sand.u32 %s24, 1
          %s353 = scalar_lea.sflag [#allocation3], %s352
          %s354 = sand.u32 %s170, 1
          %s355 = smul.addr %s354, 8
          %s356 = scalar_lea.vmem [#allocation12], %s355
          %358 = vsyncadd %s353, 0
          %s359 = smul.addr %s24, 8
          %s360 = scalar_lea.hbm %s6, %s359
          %s362 = sshll.u32 %s360, 4
          %s363 = int_to_ptr.hbm [resolvable:$true] %s362
          %s364 = sshll.u32 %s356, 4
          %s365 = int_to_ptr.vmem [resolvable:$true] %s364
          %367 = dma.hbm_to_vmem [thread:$0]  %s363, 128, %s365, %s353
        $region44: #{multi_head_attention.1} parent=31 // pred_fallthru
          _
      $region32: #{multi_head_attention.1} parent=5 // pred_fallthru
        _
      %p368 = scmp.le.s32.totalorder 1, %s24
      %p369 = scmp.lt.s32.totalorder %s24, 3
      %p370 = pnand %p368, %p369
      %p371 = pneg %p370
      // Predicated region
      $region45: #{multi_head_attention.1} parent=5 // pred_check
        _
      $region46: #{multi_head_attention.1} parent=5 // pred_check_branch
        %373 = sbr.rel (%p370) target = $region48
      $region47: #{multi_head_attention.1} parent=5 // pred_region
        %s374 = ssub.s32 %s24, 1
        // Predicated region
        $region49: #{multi_head_attention.1} parent=47 // pred_check
          %p375 = pneg %p45
        $region50: #{multi_head_attention.1} parent=47 // pred_check_branch
          %377 = sbr.rel (%p375) target = $region52
        $region51: #{multi_head_attention.1} parent=47 // pred_region
          %379 = dma.done [#allocation3], 1536
        $region52: #{multi_head_attention.1} parent=47 // pred_fallthru
          _
        // Predicated region
        $region53: #{multi_head_attention.1} parent=47 // pred_check
          %p380 = pneg %p66
        $region54: #{multi_head_attention.1} parent=47 // pred_check_branch
          %382 = sbr.rel (%p380) target = $region56
        $region55: #{multi_head_attention.1} parent=47 // pred_region
          %384 = dma.done [#allocation6], 48
        $region56: #{multi_head_attention.1} parent=47 // pred_fallthru
          _
        // Predicated region
        $region57: #{multi_head_attention.1} parent=47 // pred_check
          %p385 = pneg %p87
        $region58: #{multi_head_attention.1} parent=47 // pred_check_branch
          %387 = sbr.rel (%p385) target = $region60
        $region59: #{multi_head_attention.1} parent=47 // pred_region
          %389 = dma.done [#allocation6], 512
        $region60: #{multi_head_attention.1} parent=47 // pred_fallthru
          _
        // Predicated region
        $region61: #{multi_head_attention.1} parent=47 // pred_check
          %p390 = pneg %p108
        $region62: #{multi_head_attention.1} parent=47 // pred_check_branch
          %392 = sbr.rel (%p390) target = $region64
        $region63: #{multi_head_attention.1} parent=47 // pred_region
          %394 = dma.done [#allocation9], 16
        $region64: #{multi_head_attention.1} parent=47 // pred_fallthru
          _
        %s395 = sand.u32 %s29, 1
        %s396 = scalar_lea.sflag [#allocation3], %s395
        %s397 = sand.u32 %s121, 1
        %s398 = smul.addr %s397, 8
        %s399 = scalar_lea.vmem [#allocation10], %s398
        // Predicated region
        $region65: #{multi_head_attention.1} parent=47 // pred_check
          %p400 = pneg %p134
        $region66: #{multi_head_attention.1} parent=47 // pred_check_branch
          %402 = sbr.rel (%p400) target = $region68
        $region67: #{multi_head_attention.1} parent=47 // pred_region
          %404 = dma.done %s396, 128
        $region68: #{multi_head_attention.1} parent=47 // pred_fallthru
          _
        %s405 = sand.u32 %s29, 1
        %s406 = scalar_lea.sflag [#allocation3], %s405
        %s407 = sand.u32 %s147, 1
        %s408 = smul.addr %s407, 8
        %s409 = scalar_lea.vmem [#allocation11], %s408
        // Predicated region
        $region69: #{multi_head_attention.1} parent=47 // pred_check
          %p410 = pneg %p160
        $region70: #{multi_head_attention.1} parent=47 // pred_check_branch
          %412 = sbr.rel (%p410) target = $region72
        $region71: #{multi_head_attention.1} parent=47 // pred_region
          %414 = dma.done %s406, 128
        $region72: #{multi_head_attention.1} parent=47 // pred_fallthru
          _
        %s415 = sand.u32 %s29, 1
        %s416 = scalar_lea.sflag [#allocation3], %s415
        %s417 = sand.u32 %s173, 1
        %s418 = smul.addr %s417, 8
        %s419 = scalar_lea.vmem [#allocation12], %s418
        // Predicated region
        $region73: #{multi_head_attention.1} parent=47 // pred_check
          %p420 = pneg %p186
        $region74: #{multi_head_attention.1} parent=47 // pred_check_branch
          %422 = sbr.rel (%p420) target = $region76
        $region75: #{multi_head_attention.1} parent=47 // pred_region
          %424 = dma.done %s416, 128
        $region76: #{multi_head_attention.1} parent=47 // pred_fallthru
          _
        %p425 = pneg %p45
        %p426 = pneg %p42
        %p427 = pneg %p66
        %p428 = pneg %p63
        %p429 = pneg %p87
        %p430 = pneg %p84
        %p431 = pneg %p108
        %p432 = pneg %p105
        %s433 = sand.u32 %s29, 1
        %s434 = scalar_lea.sflag [#allocation3], %s433
        %s435 = sand.u32 %s121, 1
        %s436 = smul.addr %s435, 8
        %s437 = scalar_lea.vmem [#allocation10], %s436
        %p438 = pneg %p134
        %p439 = pneg %p131
        %s440 = sand.u32 %s29, 1
        %s441 = scalar_lea.sflag [#allocation3], %s440
        %s442 = sand.u32 %s147, 1
        %s443 = smul.addr %s442, 8
        %s444 = scalar_lea.vmem [#allocation11], %s443
        %p445 = pneg %p160
        %p446 = pneg %p157
        %s447 = sand.u32 %s29, 1
        %s448 = scalar_lea.sflag [#allocation3], %s447
        %s449 = sand.u32 %s173, 1
        %s450 = smul.addr %s449, 8
        %s451 = scalar_lea.vmem [#allocation12], %s450
        %p452 = pneg %p186
        %p453 = pneg %p183
        %p454 = pneg %p212
        %p455 = pneg %p209
        %s456 = sand.u32 %s199, 1
        %s457 = scalar_lea.sflag [#allocation4], %s456
        %s458 = sand.u32 %s199, 1
        %s459 = smul.addr %s458, 8
        %s460 = scalar_lea.vmem [#allocation13], %s459
        %p461 = pneg %p238
        %p462 = pneg %p235
        %s463 = sand.u32 %s225, 1
        %s464 = scalar_lea.sflag [#allocation15], %s463
        %s465 = sand.u32 %s225, 1
        %s466 = smul.addr %s465, 32
        %s467 = scalar_lea.vmem [#allocation14], %s466
        %v468 = vld [vmem:[%s399] sm:$0xff]
        %v469 = vld [vmem:[%s409] sm:$0xff]
        %v470 = vld [vmem:[%s419] sm:$0xff]
        %v471 = vld [vmem:[#allocation2] sm:$0xff]
        %v472 = vld [vmem:[#allocation2 + $0x8] sm:$0xff]
        %v473 = vld [vmem:[#allocation2 + $0x10] sm:$0xff]
        %v474 = vld [vmem:[#allocation2 + $0x18] sm:$0xff]
        %v475 = vld [vmem:[#allocation5] sm:$0x1]
        %v477 = vperm.slane %v475, 0
        %vm479 = vcmask 261120
        %v481 = vsel %vm479, %v468, 0
        %483 = vmatpush.msra.mxu0 0.0
        %484 = vmatpush.msra.mxu0 0.0
        %485 = vmatpush.msra.mxu0 0.0
        %486 = vmatpush.msra.mxu0 0.0
        %487 = vmatpush.msra.mxu0 0.0
        %488 = vmatpush.msra.mxu0 0.0
        %489 = vmatpush.msra.mxu0 0.0
        %490 = vmatpush.msra.mxu0 0.0
        %491 = vmatpush.msra.mxu0 0.0
        %492 = vmatpush.msra.mxu0 0.0
        %493 = vmatpush.msra.mxu0 0.0
        %494 = vmatpush.msra.mxu0 0.0
        %495 = vmatpush.msra.mxu0 %v474
        %496 = vmatpush.msra.mxu0 %v473
        %497 = vmatpush.msra.mxu0 %v472
        %498 = vmatpush.msra.mxu0 %v471
        %499 = vmatmul.f32.gmra.mxu0 %v481
        %v500 = vpop.f32.mrf.mxu0
        %v501 = vadd.f32 %v477, %v500
        %502 = vdwg.mxu0
        %v503 = vmul.f32 %v501, 0.35355338
        %s504 = scalar_lea.vmem [#allocation2], 32
        %v505 = vld [vmem:[%s504] sm:$0xff]
        %v506 = vld [vmem:[%s504 + $0x8] sm:$0xff]
        %v507 = vld [vmem:[%s504 + $0x10] sm:$0xff]
        %v508 = vld [vmem:[%s504 + $0x18] sm:$0xff]
        %s509 = scalar_lea.vmem [#allocation5], 1
        %v510 = vld [vmem:[%s509] sm:$0x1]
        %v512 = vperm.slane %v510, 0
        %v515 = vsel %vm479, %v469, 0
        %517 = vmatpush.msra.mxu0 0.0
        %518 = vmatpush.msra.mxu0 0.0
        %519 = vmatpush.msra.mxu0 0.0
        %520 = vmatpush.msra.mxu0 0.0
        %521 = vmatpush.msra.mxu0 0.0
        %522 = vmatpush.msra.mxu0 0.0
        %523 = vmatpush.msra.mxu0 0.0
        %524 = vmatpush.msra.mxu0 0.0
        %525 = vmatpush.msra.mxu0 0.0
        %526 = vmatpush.msra.mxu0 0.0
        %527 = vmatpush.msra.mxu0 0.0
        %528 = vmatpush.msra.mxu0 0.0
        %529 = vmatpush.msra.mxu0 %v508
        %530 = vmatpush.msra.mxu0 %v507
        %531 = vmatpush.msra.mxu0 %v506
        %532 = vmatpush.msra.mxu0 %v505
        %533 = vmatmul.f32.gmra.mxu0 %v515
        %v534 = vpop.f32.mrf.mxu0
        %v535 = vadd.f32 %v512, %v534
        %536 = vdwg.mxu0
        %s537 = scalar_lea.vmem [#allocation2], 64
        %v538 = vld [vmem:[%s537] sm:$0xff]
        %v539 = vld [vmem:[%s537 + $0x8] sm:$0xff]
        %v540 = vld [vmem:[%s537 + $0x10] sm:$0xff]
        %v541 = vld [vmem:[%s537 + $0x18] sm:$0xff]
        %s542 = scalar_lea.vmem [#allocation5], 2
        %v543 = vld [vmem:[%s542] sm:$0x1]
        %v545 = vperm.slane %v543, 0
        %v548 = vsel %vm479, %v470, 0
        %550 = vmatpush.msra.mxu0 0.0
        %551 = vmatpush.msra.mxu0 0.0
        %552 = vmatpush.msra.mxu0 0.0
        %553 = vmatpush.msra.mxu0 0.0
        %554 = vmatpush.msra.mxu0 0.0
        %555 = vmatpush.msra.mxu0 0.0
        %556 = vmatpush.msra.mxu0 0.0
        %557 = vmatpush.msra.mxu0 0.0
        %558 = vmatpush.msra.mxu0 0.0
        %559 = vmatpush.msra.mxu0 0.0
        %560 = vmatpush.msra.mxu0 0.0
        %561 = vmatpush.msra.mxu0 0.0
        %562 = vmatpush.msra.mxu0 %v541
        %563 = vmatpush.msra.mxu0 %v540
        %564 = vmatpush.msra.mxu0 %v539
        %565 = vmatpush.msra.mxu0 %v538
        %566 = vmatmul.f32.gmra.mxu0 %v548
        %v567 = vpop.f32.mrf.mxu0
        %v568 = vadd.f32 %v545, %v567
        %569 = vdwg.mxu0
        %vm570 = vcmask 64512
        %v572 = vsel %vm570, %v503, 0
        %v575 = vsel %vm570, %v535, 0
        %577 = vmatpush.xpose.msra.mxu0 0.0
        %578 = vmatpush.xpose.msra.mxu0 0.0
        %579 = vmatpush.xpose.msra.mxu0 0.0
        %580 = vmatpush.xpose.msra.mxu0 0.0
        %581 = vmatpush.xpose.msra.mxu0 0.0
        %582 = vmatpush.xpose.msra.mxu0 0.0
        %583 = vmatpush.xpose.msra.mxu0 0.0
        %584 = vmatpush.xpose.msra.mxu0 0.0
        %585 = vmatpush.xpose.msra.mxu0 0.0
        %586 = vmatpush.xpose.msra.mxu0 0.0
        %587 = vmatpush.xpose.msra.mxu0 0.0
        %588 = vmatpush.xpose.msra.mxu0 0.0
        %589 = vmatpush.xpose.msra.mxu0 0.0
        %590 = vmatpush.xpose.msra.mxu0 0.0
        %591 = vmatpush.xpose.msra.mxu0 0.0
        %592 = vmatpush.xpose.msra.mxu0 %v575
        %593 = vmatmul.f32.gmra.mxu0 %v572
        %v594 = vpop.f32.mrf.mxu0
        %v595 = vadd.f32 0.0, %v594
        %596 = vdwg.mxu0
        %v597 = vsel %vm570, %v595, -inf
        %598 = vmax.xlane.f32.xlu0 %v597
        %v599 = vpop.xlane.xlu0 %598
        %v600 = vsub.f32 %v595, %v599
        %v601 = vmul.f32 %v600, 1.442695
        %v602 = vpow.pop %v601
        %v603 = vsel %vm570, %v602, 0.0
        %604 = vadd.xlane.f32.xlu0 %v603
        %v605 = vpop.xlane.xlu0 %604
        %v606 = vrcp.pop %v605
        %v607 = vmul.f32 %v605, %v606
        %v608 = vsub.f32 1.0, %v607
        %v609 = vmul.f32 %v606, %v608
        %v610 = vadd.f32 %v606, %v609
        %vm611 = vweird.f32 %v605
        %vm612 = vweird.f32 %v606
        %vm613 = vmor %vm611, %vm612
        %v614 = vsel %vm613, %v606, %v610
        %v615 = vand.u32 2147483647, %v605
        %vm616 = vcmp.eq.f32.partialorder %v615, 8.507059e+37
        %v617 = vand.u32 %v605, 2147483648
        %v618 = vor.u32 1.1754944e-38, %v617
        %v619 = vsel %vm616, %v618, %v614
        %v620 = vmul.f32 %v602, %v619
        %v622 = vsel %vm570, %v620, 0
        %624 = vmatpush.msra.mxu0 0.0
        %625 = vmatpush.msra.mxu0 0.0
        %626 = vmatpush.msra.mxu0 0.0
        %627 = vmatpush.msra.mxu0 0.0
        %628 = vmatpush.msra.mxu0 0.0
        %629 = vmatpush.msra.mxu0 0.0
        %630 = vmatpush.msra.mxu0 0.0
        %631 = vmatpush.msra.mxu0 0.0
        %632 = vmatpush.msra.mxu0 0.0
        %633 = vmatpush.msra.mxu0 0.0
        %634 = vmatpush.msra.mxu0 0.0
        %635 = vmatpush.msra.mxu0 0.0
        %636 = vmatpush.msra.mxu0 0.0
        %637 = vmatpush.msra.mxu0 0.0
        %638 = vmatpush.msra.mxu0 0.0
        %639 = vmatpush.msra.mxu0 %v568
        %640 = vmatmul.f32.gmra.mxu0 %v622
        %v641 = vpop.f32.mrf.mxu0
        %v642 = vadd.f32 0.0, %v641
        %643 = vdwg.mxu0
        %644 = vrot.lane.b32.xlu0 %v503, 120
        %v645 = vpop.permute.xlu0 %644
        %646 = vrot.lane.b32.xlu0 %v535, 120
        %v647 = vpop.permute.xlu0 %646
        %v648 = vsel %vm570, %v645, 0
        %v650 = vsel %vm570, %v647, 0
        %652 = vmatpush.xpose.msra.mxu0 0.0
        %653 = vmatpush.xpose.msra.mxu0 0.0
        %654 = vmatpush.xpose.msra.mxu0 0.0
        %655 = vmatpush.xpose.msra.mxu0 0.0
        %656 = vmatpush.xpose.msra.mxu0 0.0
        %657 = vmatpush.xpose.msra.mxu0 0.0
        %658 = vmatpush.xpose.msra.mxu0 0.0
        %659 = vmatpush.xpose.msra.mxu0 0.0
        %660 = vmatpush.xpose.msra.mxu0 0.0
        %661 = vmatpush.xpose.msra.mxu0 0.0
        %662 = vmatpush.xpose.msra.mxu0 0.0
        %663 = vmatpush.xpose.msra.mxu0 0.0
        %664 = vmatpush.xpose.msra.mxu0 0.0
        %665 = vmatpush.xpose.msra.mxu0 0.0
        %666 = vmatpush.xpose.msra.mxu0 0.0
        %667 = vmatpush.xpose.msra.mxu0 %v650
        %668 = vmatmul.f32.gmra.mxu0 %v648
        %v669 = vpop.f32.mrf.mxu0
        %v670 = vadd.f32 0.0, %v669
        %671 = vdwg.mxu0
        %v672 = vsel %vm570, %v670, -inf
        %673 = vmax.xlane.f32.xlu0 %v672
        %v674 = vpop.xlane.xlu0 %673
        %v675 = vsub.f32 %v670, %v674
        %v676 = vmul.f32 %v675, 1.442695
        %v677 = vpow.pop %v676
        %v678 = vsel %vm570, %v677, 0.0
        %679 = vadd.xlane.f32.xlu0 %v678
        %v680 = vpop.xlane.xlu0 %679
        %v681 = vrcp.pop %v680
        %v682 = vmul.f32 %v680, %v681
        %v683 = vsub.f32 1.0, %v682
        %v684 = vmul.f32 %v681, %v683
        %v685 = vadd.f32 %v681, %v684
        %vm686 = vweird.f32 %v680
        %vm687 = vweird.f32 %v681
        %vm688 = vmor %vm686, %vm687
        %v689 = vsel %vm688, %v681, %v685
        %v690 = vand.u32 2147483647, %v680
        %vm691 = vcmp.eq.f32.partialorder %v690, 8.507059e+37
        %v692 = vand.u32 %v680, 2147483648
        %v693 = vor.u32 1.1754944e-38, %v692
        %v694 = vsel %vm691, %v693, %v689
        %v695 = vmul.f32 %v677, %v694
        %697 = vrot.lane.b32.xlu0 %v568, 120
        %v698 = vpop.permute.xlu0 %697
        %v701 = vsel %vm570, %v695, 0
        %703 = vmatpush.msra.mxu0 0.0
        %704 = vmatpush.msra.mxu0 0.0
        %705 = vmatpush.msra.mxu0 0.0
        %706 = vmatpush.msra.mxu0 0.0
        %707 = vmatpush.msra.mxu0 0.0
        %708 = vmatpush.msra.mxu0 0.0
        %709 = vmatpush.msra.mxu0 0.0
        %710 = vmatpush.msra.mxu0 0.0
        %711 = vmatpush.msra.mxu0 0.0
        %712 = vmatpush.msra.mxu0 0.0
        %713 = vmatpush.msra.mxu0 0.0
        %714 = vmatpush.msra.mxu0 0.0
        %715 = vmatpush.msra.mxu0 0.0
        %716 = vmatpush.msra.mxu0 0.0
        %717 = vmatpush.msra.mxu0 0.0
        %718 = vmatpush.msra.mxu0 %v698
        %719 = vmatmul.f32.gmra.mxu0 %v701
        %v720 = vpop.f32.mrf.mxu0
        %v721 = vadd.f32 0.0, %v720
        %722 = vdwg.mxu0
        %723 = vrot.lane.b32.xlu0 %v503, 112
        %v724 = vpop.permute.xlu0 %723
        %725 = vrot.lane.b32.xlu0 %v535, 112
        %v726 = vpop.permute.xlu0 %725
        %v727 = vsel %vm570, %v724, 0
        %v729 = vsel %vm570, %v726, 0
        %731 = vmatpush.xpose.msra.mxu0 0.0
        %732 = vmatpush.xpose.msra.mxu0 0.0
        %733 = vmatpush.xpose.msra.mxu0 0.0
        %734 = vmatpush.xpose.msra.mxu0 0.0
        %735 = vmatpush.xpose.msra.mxu0 0.0
        %736 = vmatpush.xpose.msra.mxu0 0.0
        %737 = vmatpush.xpose.msra.mxu0 0.0
        %738 = vmatpush.xpose.msra.mxu0 0.0
        %739 = vmatpush.xpose.msra.mxu0 0.0
        %740 = vmatpush.xpose.msra.mxu0 0.0
        %741 = vmatpush.xpose.msra.mxu0 0.0
        %742 = vmatpush.xpose.msra.mxu0 0.0
        %743 = vmatpush.xpose.msra.mxu0 0.0
        %744 = vmatpush.xpose.msra.mxu0 0.0
        %745 = vmatpush.xpose.msra.mxu0 0.0
        %746 = vmatpush.xpose.msra.mxu0 %v729
        %747 = vmatmul.f32.gmra.mxu0 %v727
        %v748 = vpop.f32.mrf.mxu0
        %v749 = vadd.f32 0.0, %v748
        %750 = vdwg.mxu0
        %v751 = vsel %vm570, %v749, -inf
        %752 = vmax.xlane.f32.xlu0 %v751
        %v753 = vpop.xlane.xlu0 %752
        %v754 = vsub.f32 %v749, %v753
        %v755 = vmul.f32 %v754, 1.442695
        %v756 = vpow.pop %v755
        %v757 = vsel %vm570, %v756, 0.0
        %758 = vadd.xlane.f32.xlu0 %v757
        %v759 = vpop.xlane.xlu0 %758
        %v760 = vrcp.pop %v759
        %v761 = vmul.f32 %v759, %v760
        %v762 = vsub.f32 1.0, %v761
        %v763 = vmul.f32 %v760, %v762
        %v764 = vadd.f32 %v760, %v763
        %vm765 = vweird.f32 %v759
        %vm766 = vweird.f32 %v760
        %vm767 = vmor %vm765, %vm766
        %v768 = vsel %vm767, %v760, %v764
        %v769 = vand.u32 2147483647, %v759
        %vm770 = vcmp.eq.f32.partialorder %v769, 8.507059e+37
        %v771 = vand.u32 %v759, 2147483648
        %v772 = vor.u32 1.1754944e-38, %v771
        %v773 = vsel %vm770, %v772, %v768
        %v774 = vmul.f32 %v756, %v773
        %775 = vrot.lane.b32.xlu0 %v568, 112
        %v776 = vpop.permute.xlu0 %775
        %v779 = vsel %vm570, %v774, 0
        %781 = vmatpush.msra.mxu0 0.0
        %782 = vmatpush.msra.mxu0 0.0
        %783 = vmatpush.msra.mxu0 0.0
        %784 = vmatpush.msra.mxu0 0.0
        %785 = vmatpush.msra.mxu0 0.0
        %786 = vmatpush.msra.mxu0 0.0
        %787 = vmatpush.msra.mxu0 0.0
        %788 = vmatpush.msra.mxu0 0.0
        %789 = vmatpush.msra.mxu0 0.0
        %790 = vmatpush.msra.mxu0 0.0
        %791 = vmatpush.msra.mxu0 0.0
        %792 = vmatpush.msra.mxu0 0.0
        %793 = vmatpush.msra.mxu0 0.0
        %794 = vmatpush.msra.mxu0 0.0
        %795 = vmatpush.msra.mxu0 0.0
        %796 = vmatpush.msra.mxu0 %v776
        %797 = vmatmul.f32.gmra.mxu0 %v779
        %v798 = vpop.f32.mrf.mxu0
        %v799 = vadd.f32 0.0, %v798
        %800 = vdwg.mxu0
        %801 = vrot.lane.b32.xlu0 %v503, 104
        %v802 = vpop.permute.xlu0 %801
        %803 = vrot.lane.b32.xlu0 %v535, 104
        %v804 = vpop.permute.xlu0 %803
        %v805 = vsel %vm570, %v802, 0
        %v807 = vsel %vm570, %v804, 0
        %809 = vmatpush.xpose.msra.mxu0 0.0
        %810 = vmatpush.xpose.msra.mxu0 0.0
        %811 = vmatpush.xpose.msra.mxu0 0.0
        %812 = vmatpush.xpose.msra.mxu0 0.0
        %813 = vmatpush.xpose.msra.mxu0 0.0
        %814 = vmatpush.xpose.msra.mxu0 0.0
        %815 = vmatpush.xpose.msra.mxu0 0.0
        %816 = vmatpush.xpose.msra.mxu0 0.0
        %817 = vmatpush.xpose.msra.mxu0 0.0
        %818 = vmatpush.xpose.msra.mxu0 0.0
        %819 = vmatpush.xpose.msra.mxu0 0.0
        %820 = vmatpush.xpose.msra.mxu0 0.0
        %821 = vmatpush.xpose.msra.mxu0 0.0
        %822 = vmatpush.xpose.msra.mxu0 0.0
        %823 = vmatpush.xpose.msra.mxu0 0.0
        %824 = vmatpush.xpose.msra.mxu0 %v807
        %825 = vmatmul.f32.gmra.mxu0 %v805
        %v826 = vpop.f32.mrf.mxu0
        %v827 = vadd.f32 0.0, %v826
        %828 = vdwg.mxu0
        %v829 = vsel %vm570, %v827, -inf
        %830 = vmax.xlane.f32.xlu0 %v829
        %v831 = vpop.xlane.xlu0 %830
        %v832 = vsub.f32 %v827, %v831
        %v833 = vmul.f32 %v832, 1.442695
        %v834 = vpow.pop %v833
        %v835 = vsel %vm570, %v834, 0.0
        %836 = vadd.xlane.f32.xlu0 %v835
        %v837 = vpop.xlane.xlu0 %836
        %v838 = vrcp.pop %v837
        %v839 = vmul.f32 %v837, %v838
        %v840 = vsub.f32 1.0, %v839
        %v841 = vmul.f32 %v838, %v840
        %v842 = vadd.f32 %v838, %v841
        %vm843 = vweird.f32 %v837
        %vm844 = vweird.f32 %v838
        %vm845 = vmor %vm843, %vm844
        %v846 = vsel %vm845, %v838, %v842
        %v847 = vand.u32 2147483647, %v837
        %vm848 = vcmp.eq.f32.partialorder %v847, 8.507059e+37
        %v849 = vand.u32 %v837, 2147483648
        %v850 = vor.u32 1.1754944e-38, %v849
        %v851 = vsel %vm848, %v850, %v846
        %v852 = vmul.f32 %v834, %v851
        %853 = vrot.lane.b32.xlu0 %v568, 104
        %v854 = vpop.permute.xlu0 %853
        %v857 = vsel %vm570, %v852, 0
        %859 = vmatpush.msra.mxu0 0.0
        %860 = vmatpush.msra.mxu0 0.0
        %861 = vmatpush.msra.mxu0 0.0
        %862 = vmatpush.msra.mxu0 0.0
        %863 = vmatpush.msra.mxu0 0.0
        %864 = vmatpush.msra.mxu0 0.0
        %865 = vmatpush.msra.mxu0 0.0
        %866 = vmatpush.msra.mxu0 0.0
        %867 = vmatpush.msra.mxu0 0.0
        %868 = vmatpush.msra.mxu0 0.0
        %869 = vmatpush.msra.mxu0 0.0
        %870 = vmatpush.msra.mxu0 0.0
        %871 = vmatpush.msra.mxu0 0.0
        %872 = vmatpush.msra.mxu0 0.0
        %873 = vmatpush.msra.mxu0 0.0
        %874 = vmatpush.msra.mxu0 %v854
        %875 = vmatmul.f32.gmra.mxu0 %v857
        %v876 = vpop.f32.mrf.mxu0
        %v877 = vadd.f32 0.0, %v876
        %878 = vdwg.mxu0
        %879 = vst.msk [vmem:[%s467] sm:$0xff] %vm570, %v620
        %880 = vst.msk [vmem:[%s467 + $0x8] sm:$0xff] %vm570, %v695
        %881 = vst.msk [vmem:[%s467 + $0x10] sm:$0xff] %vm570, %v774
        %882 = vst.msk [vmem:[%s467 + $0x18] sm:$0xff] %vm570, %v852
        %884 = vrot.lane.b32.xlu0 %v721, 8
        %v885 = vpop.permute.xlu0 %884
        %888 = vrot.lane.b32.xlu0 %v799, 16
        %v889 = vpop.permute.xlu0 %888
        %892 = vrot.lane.b32.xlu0 %v877, 24
        %v893 = vpop.permute.xlu0 %892
        %v895 = vsel %vm570, %v642, %v885
        %vm896 = vcmask 130048
        %v897 = vsel %vm896, %v895, %v889
        %vm898 = vcmask 195584
        %v899 = vsel %vm898, %v897, %v893
        %v900 = vld [vmem:[#allocation7] sm:$0xff]
        %v901 = vld [vmem:[#allocation7 + $0x8] sm:$0xff]
        %v902 = vld [vmem:[#allocation7 + $0x10] sm:$0xff]
        %v903 = vld [vmem:[#allocation7 + $0x18] sm:$0xff]
        %v904 = vld [vmem:[#allocation8] sm:$0x1]
        %v906 = vperm.slane %v904, 0
        %v909 = vsel %vm479, %v899, 0
        %911 = vmatpush.msra.mxu0 0.0
        %912 = vmatpush.msra.mxu0 0.0
        %913 = vmatpush.msra.mxu0 0.0
        %914 = vmatpush.msra.mxu0 0.0
        %915 = vmatpush.msra.mxu0 0.0
        %916 = vmatpush.msra.mxu0 0.0
        %917 = vmatpush.msra.mxu0 0.0
        %918 = vmatpush.msra.mxu0 0.0
        %919 = vmatpush.msra.mxu0 0.0
        %920 = vmatpush.msra.mxu0 0.0
        %921 = vmatpush.msra.mxu0 0.0
        %922 = vmatpush.msra.mxu0 0.0
        %923 = vmatpush.msra.mxu0 %v903
        %924 = vmatpush.msra.mxu0 %v902
        %925 = vmatpush.msra.mxu0 %v901
        %926 = vmatpush.msra.mxu0 %v900
        %927 = vmatmul.f32.gmra.mxu0 %v909
        %v928 = vpop.f32.mrf.mxu0
        %v929 = vadd.f32 %v906, %v928
        %930 = vdwg.mxu0
        %931 = vst.msk [vmem:[%s460] sm:$0xff] %vm479, %v929
        %s932 = sand.u32 %s199, 1
        %s933 = scalar_lea.sflag [#allocation4], %s932
        %s934 = sand.u32 %s199, 1
        %s935 = smul.addr %s934, 8
        %s936 = scalar_lea.vmem [#allocation13], %s935
        %s937 = sand.u32 %s225, 1
        %s938 = scalar_lea.sflag [#allocation15], %s937
        %s939 = sand.u32 %s225, 1
        %s940 = smul.addr %s939, 32
        %s941 = scalar_lea.vmem [#allocation14], %s940
        // Predicated region
        $region77: #{multi_head_attention.1} parent=47 // pred_check
          %p942 = pneg %p209
        $region78: #{multi_head_attention.1} parent=47 // pred_check_branch
          %944 = sbr.rel (%p942) target = $region80
        $region79: #{multi_head_attention.1} parent=47 // pred_region
          %946 = vsyncadd %s933, 0
          %s947 = smul.addr %s29, 8
          %s948 = scalar_lea.hbm %s7, %s947
          %s950 = sshll.u32 %s936, 4
          %s951 = int_to_ptr.vmem [resolvable:$true] %s950
          %s952 = sshll.u32 %s948, 4
          %s953 = int_to_ptr.hbm [resolvable:$true] %s952
          %955 = dma.vmem_to_hbm [thread:$0]  %s951, 128, %s953, %s933
        $region80: #{multi_head_attention.1} parent=47 // pred_fallthru
          _
        // Predicated region
        $region81: #{multi_head_attention.1} parent=47 // pred_check
          %p956 = pneg %p235
        $region82: #{multi_head_attention.1} parent=47 // pred_check_branch
          %958 = sbr.rel (%p956) target = $region84
        $region83: #{multi_head_attention.1} parent=47 // pred_region
          %960 = vsyncadd %s938, 0
          %s961 = smul.addr %s29, 4
          %s962 = smul.addr %s961, 8
          %s963 = scalar_lea.hbm %s8, %s962
          %s964 = sshll.u32 %s941, 4
          %s965 = int_to_ptr.vmem [resolvable:$true] %s964
          %s966 = sshll.u32 %s963, 4
          %s967 = int_to_ptr.hbm [resolvable:$true] %s966
          %972 = dma.vmem_to_hbm [thread:$0]  %s965, 512, %s967, %s938, 128, 128, 8
        $region84: #{multi_head_attention.1} parent=47 // pred_fallthru
          _
      $region48: #{multi_head_attention.1} parent=5 // pred_fallthru
        _
      %p973 = scmp.le.s32.totalorder 2, %s24
      // Predicated region
      $region85: #{multi_head_attention.1} parent=5 // pred_check
        %p974 = pneg %p973
      $region86: #{multi_head_attention.1} parent=5 // pred_check_branch
        %976 = sbr.rel (%p974) target = $region88
      $region87: #{multi_head_attention.1} parent=5 // pred_region
        %s977 = ssub.s32 %s24, 2
        // Predicated region
        $region89: #{multi_head_attention.1} parent=87 // pred_check
          %p978 = pneg %p215
        $region90: #{multi_head_attention.1} parent=87 // pred_check_branch
          %980 = sbr.rel (%p978) target = $region92
        $region91: #{multi_head_attention.1} parent=87 // pred_region
          %s981 = sand.u32 %s200, 1
          %s982 = scalar_lea.sflag [#allocation4], %s981
          %s983 = sand.u32 %s200, 1
          %s984 = smul.addr %s983, 8
          %s985 = scalar_lea.vmem [#allocation13], %s984
          %987 = dma.done %s982, 128
        $region92: #{multi_head_attention.1} parent=87 // pred_fallthru
          _
        // Predicated region
        $region93: #{multi_head_attention.1} parent=87 // pred_check
          %p988 = pneg %p241
        $region94: #{multi_head_attention.1} parent=87 // pred_check_branch
          %990 = sbr.rel (%p988) target = $region96
        $region95: #{multi_head_attention.1} parent=87 // pred_region
          %s991 = sand.u32 %s226, 1
          %s992 = scalar_lea.sflag [#allocation15], %s991
          %s993 = sand.u32 %s226, 1
          %s994 = smul.addr %s993, 32
          %s995 = scalar_lea.vmem [#allocation14], %s994
          %997 = dma.done %s992, 512
        $region96: #{multi_head_attention.1} parent=87 // pred_fallthru
          _
      $region88: #{multi_head_attention.1} parent=5 // pred_fallthru
        _
    $region6: #{multi_head_attention.1} parent=1 // loop_footer
      %s28 = sadd.s32 1, %s24
    $region7: #{multi_head_attention.1} parent=1 // loop_footer_branch
      %23 = sbr.rel target = $region3
    $region8: #{multi_head_attention.1} parent=1 // loop_exit
      _
    %998 = vsyncpa [#allocation3], 1
    %s999 = scalar_lea.sflag [#allocation3], 1
    %1000 = vsyncpa %s999, 1
    %1001 = vsyncpa [#allocation6], 1
    %1002 = vsyncpa [#allocation9], 1
    %1003 = vsyncpa [#allocation4], 1
    %s1004 = scalar_lea.sflag [#allocation4], 1
    %1005 = vsyncpa %s1004, 1
    %1006 = vsyncpa [#allocation15], 1
    %s1007 = scalar_lea.sflag [#allocation15], 1
    %1008 = vsyncpa %s1007, 1

</llo_original>
